<compile_context>
chip_gen: v7x
topology: tpu7x:2x2x1
jax: 0.10.0
libtpu: 0.0.40
codegen_flags: <defaults>
</compile_context>

<pallas_src>
import math

import jax
import jax.numpy as jnp
from jax.experimental import pallas as pl
from jax.experimental.pallas import tpu as pltpu

_VMEM_LIMIT = 32 * 1024 * 1024  # safe on v5e/v6e/v7x


def _pick_tile(dim, preferred, align):
    """Largest multiple of `align` that is <= preferred and divides dim.

    Falls back to the full dimension (always a legal block extent)."""
    t = (min(dim, preferred) // align) * align
    while t >= align:
        if dim % t == 0:
            return t
        t -= align
    return dim


# ---------------------------------------------------------------------------
# Tiled projection matmul (optionally with bias) -- worked matmul pattern
# ---------------------------------------------------------------------------

def _matmul_kernel(x_ref, w_ref, o_ref, acc_ref):
    @pl.when(pl.program_id(2) == 0)
    def _init():
        acc_ref[...] = jnp.zeros_like(acc_ref)

    acc_ref[...] += jnp.dot(x_ref[...], w_ref[...],
                            preferred_element_type=jnp.float32)

    @pl.when(pl.program_id(2) == pl.num_programs(2) - 1)
    def _fin():
        o_ref[...] = acc_ref[...].astype(o_ref.dtype)


def _matmul_bias_kernel(x_ref, w_ref, b_ref, o_ref, acc_ref):
    @pl.when(pl.program_id(2) == 0)
    def _init():
        acc_ref[...] = jnp.zeros_like(acc_ref)

    acc_ref[...] += jnp.dot(x_ref[...], w_ref[...],
                            preferred_element_type=jnp.float32)

    @pl.when(pl.program_id(2) == pl.num_programs(2) - 1)
    def _fin():
        o_ref[...] = (acc_ref[...]
                      + b_ref[...].astype(jnp.float32)).astype(o_ref.dtype)


def pallas_matmul(x, w, bias=None, *, tm=512, tn=256, tk=512):
    """Tiled x @ w (+ bias) with fp32 accumulation and pipelined DMA."""
    M, K = x.shape
    _, N = w.shape
    tm = _pick_tile(M, tm, 8)      # sublane-aligned rows
    tn = _pick_tile(N, tn, 128)    # lane-aligned output width (256-pref for v6e/v7x MXU)
    tk = _pick_tile(K, tk, 128)
    grid = (M // tm, N // tn, K // tk)

    in_specs = [
        pl.BlockSpec((tm, tk), lambda i, j, k: (i, k)),
        pl.BlockSpec((tk, tn), lambda i, j, k: (k, j)),
    ]
    args = (x, w)
    kernel = _matmul_kernel
    if bias is not None:
        in_specs.append(pl.BlockSpec((1, tn), lambda i, j, k: (0, j)))
        args = (x, w, bias.reshape(1, N))
        kernel = _matmul_bias_kernel

    return pl.pallas_call(
        kernel,
        out_shape=jax.ShapeDtypeStruct((M, N), x.dtype),
        grid_spec=pltpu.PrefetchScalarGridSpec(
            num_scalar_prefetch=0,
            grid=grid,
            in_specs=in_specs,
            out_specs=pl.BlockSpec((tm, tn), lambda i, j, k: (i, j)),
            scratch_shapes=[pltpu.VMEM((tm, tn), jnp.float32)],
        ),
        compiler_params=pltpu.CompilerParams(
            dimension_semantics=("parallel", "parallel", "arbitrary"),
            vmem_limit_bytes=_VMEM_LIMIT,
        ),
        cost_estimate=pl.CostEstimate(
            flops=2 * M * N * K,
            transcendentals=0,
            bytes_accessed=(M * K + K * N + M * N) * x.dtype.itemsize,
        ),
    )(*args)


# ---------------------------------------------------------------------------
# Flash attention: online softmax over a tiled KV axis, lane-dense output
# ---------------------------------------------------------------------------

def _flash_attn_kernel(q_ref, k_ref, v_ref, o_ref, m_sc, l_sc, acc_sc):
    # q_ref: (1, H, tq, D), k_ref/v_ref: (1, H, tkv, D), o_ref: (1, tq, H*D)
    kv = pl.program_id(2)

    @pl.when(kv == 0)
    def _init():
        m_sc[...] = jnp.full_like(m_sc, -jnp.inf)
        l_sc[...] = jnp.zeros_like(l_sc)
        acc_sc[...] = jnp.zeros_like(acc_sc)

    q = q_ref[0]          # (H, tq, D); softmax scale already folded into Wq
    k = k_ref[0]          # (H, tkv, D)
    v = v_ref[0]          # (H, tkv, D)

    # Batched contraction on the last dims -- MXU-native, no K transpose,
    # operands stay in their input dtype, accumulation in fp32.
    s = jnp.einsum("hqd,hkd->hqk", q, k, preferred_element_type=jnp.float32)

    m_prev = m_sc[...]
    m_new = jnp.maximum(m_prev, jnp.max(s, axis=-1, keepdims=True))
    alpha = jnp.exp(m_prev - m_new)
    p = jnp.exp(s - m_new)
    l_sc[...] = alpha * l_sc[...] + jnp.sum(p, axis=-1, keepdims=True)
    acc_sc[...] = alpha * acc_sc[...] + jnp.einsum(
        "hqk,hkd->hqd", p.astype(v.dtype), v,
        preferred_element_type=jnp.float32)
    m_sc[...] = m_new

    @pl.when(kv == pl.num_programs(2) - 1)
    def _fin():
        inv_l = pl.reciprocal(l_sc[...], approx=True)       # EUP, (H, tq, 1)
        o = (acc_sc[...] * inv_l).astype(o_ref.dtype)        # (H, tq, D)
        heads, _, d = o.shape
        # Merge heads into the lane dimension; the HBM write-back is a single
        # dense (tq, heads*d) block (no post-attention transpose round-trip).
        for h in range(heads):
            o_ref[0, :, h * d:(h + 1) * d] = o[h]


def pallas_flash_attention(q, k, v, *, tq=256, tkv=512):
    """q: (B, H, Nq, D), k/v: (B, H, Nk, D) -> out: (B, Nq, H*D)."""
    B, H, Nq, D = q.shape
    Nk = k.shape[2]
    inner = H * D
    tq = _pick_tile(Nq, tq, 8)
    tkv = _pick_tile(Nk, tkv, 8)
    grid = (B, Nq // tq, Nk // tkv)

    return pl.pallas_call(
        _flash_attn_kernel,
        out_shape=jax.ShapeDtypeStruct((B, Nq, inner), q.dtype),
        grid_spec=pltpu.PrefetchScalarGridSpec(
            num_scalar_prefetch=0,
            grid=grid,
            in_specs=[
                pl.BlockSpec((1, H, tq, D), lambda b, qi, ki: (b, 0, qi, 0)),
                pl.BlockSpec((1, H, tkv, D), lambda b, qi, ki: (b, 0, ki, 0)),
                pl.BlockSpec((1, H, tkv, D), lambda b, qi, ki: (b, 0, ki, 0)),
            ],
            out_specs=pl.BlockSpec((1, tq, inner),
                                   lambda b, qi, ki: (b, qi, 0)),
            scratch_shapes=[
                pltpu.VMEM((H, tq, 1), jnp.float32),   # running max
                pltpu.VMEM((H, tq, 1), jnp.float32),   # running denom
                pltpu.VMEM((H, tq, D), jnp.float32),   # fp32 output accumulator
            ],
        ),
        compiler_params=pltpu.CompilerParams(
            dimension_semantics=("parallel", "parallel", "arbitrary"),
            vmem_limit_bytes=_VMEM_LIMIT,
        ),
        cost_estimate=pl.CostEstimate(
            flops=4 * B * H * Nq * Nk * D,
            transcendentals=B * H * Nq * Nk,
            bytes_accessed=(q.size + k.size + v.size + B * Nq * inner)
            * q.dtype.itemsize,
        ),
    )(q, k, v)


# ---------------------------------------------------------------------------
# Module forward (glue in plain JAX; all hot paths in Pallas)
# ---------------------------------------------------------------------------

def memory_efficient_cross_attention(params, x, context=None, *, heads, dim_head):
    """Reproduces MemoryEfficientCrossAttention.forward (default path).

    Returns (out, kv_hist) where kv_hist=(k, v) for self-attention, else None.
    """
    b, n, c = x.shape
    is_self_attn = context is None
    ctx = x if context is None else context
    nk = ctx.shape[1]
    inner = heads * dim_head
    scale = 1.0 / math.sqrt(dim_head)   # xformers default scale, folded into Wq

    x2d = x.reshape(b * n, c)
    if is_self_attn:
        # Fused QKV projection: read x once, lane-dense 3*inner output.
        w_qkv = jnp.concatenate(
            [params["wq"] * scale, params["wk"], params["wv"]], axis=1)
        qkv = pallas_matmul(x2d, w_qkv)
        q2d = qkv[:, :inner]
        k2d = qkv[:, inner:2 * inner]
        v2d = qkv[:, 2 * inner:]
    else:
        ctx2d = ctx.reshape(b * nk, ctx.shape[-1])
        q2d = pallas_matmul(x2d, params["wq"] * scale)
        kv = pallas_matmul(ctx2d,
                           jnp.concatenate([params["wk"], params["wv"]], axis=1))
        k2d = kv[:, :inner]
        v2d = kv[:, inner:]

    # head split: (B, N, H, D) -> (B, H, N, D)
    q4 = q2d.reshape(b, n, heads, dim_head).transpose(0, 2, 1, 3)
    k4 = k2d.reshape(b, nk, heads, dim_head).transpose(0, 2, 1, 3)
    v4 = v2d.reshape(b, nk, heads, dim_head).transpose(0, 2, 1, 3)

    kv_hist = None
    if is_self_attn:
        # module returns (b*heads, n, dim_head) -- same layout the kernel consumes
        kv_hist = (k4.reshape(b * heads, nk, dim_head),
                   v4.reshape(b * heads, nk, dim_head))

    # flash attention writes (B, N, inner) directly (heads merged in-kernel)
    out = pallas_flash_attention(q4, k4, v4)

    # to_out: Linear(inner, query_dim) with bias; Dropout(p) is identity in eval
    out2d = pallas_matmul(out.reshape(b * n, inner), params["wo"],
                          bias=params["bo"])
    return out2d.reshape(b, n, -1), kv_hist


def init_params(key, query_dim, context_dim, heads, dim_head, dtype=jnp.float32):
    inner = heads * dim_head
    k1, k2, k3, k4, k5 = jax.random.split(key, 5)

    def lin(k, fan_in, fan_out):
        bound = 1.0 / math.sqrt(fan_in)
        # stored pre-transposed: (in, out) so kernels compute x @ W
        return jax.random.uniform(k, (fan_in, fan_out), dtype, -bound, bound)

    bound_o = 1.0 / math.sqrt(inner)
    return {
        "wq": lin(k1, query_dim, inner),
        "wk": lin(k2, context_dim, inner),
        "wv": lin(k3, context_dim, inner),
        "wo": lin(k4, inner, query_dim),
        "bo": jax.random.uniform(k5, (query_dim,), dtype, -bound_o, bound_o),
    }


# ---------------------------------------------------------------------------
# Pure-JAX reference for correctness checks
# ---------------------------------------------------------------------------

def reference_forward(params, x, context=None, *, heads, dim_head):
    b, n, _ = x.shape
    ctx = x if context is None else context
    nk = ctx.shape[1]
    q = x @ params["wq"]
    k = ctx @ params["wk"]
    v = ctx @ params["wv"]
    q = q.reshape(b, n, heads, dim_head).transpose(0, 2, 1, 3)
    k = k.reshape(b, nk, heads, dim_head).transpose(0, 2, 1, 3)
    v = v.reshape(b, nk, heads, dim_head).transpose(0, 2, 1, 3)
    s = jnp.einsum("bhqd,bhkd->bhqk", q, k) / math.sqrt(dim_head)
    p = jax.nn.softmax(s, axis=-1)
    o = jnp.einsum("bhqk,bhkd->bhqd", p, v)
    o = o.transpose(0, 2, 1, 3).reshape(b, n, heads * dim_head)
    return o @ params["wo"] + params["bo"]


if __name__ == "__main__":
    # small, module-consistent shapes
    B, N, QUERY_DIM = 2, 16, 32
    HEADS, DIM_HEAD = 4, 8          # inner_dim = 32
    CTX_N = 24

    key = jax.random.PRNGKey(0)
    kx, kc, kp = jax.random.split(key, 3)
    x = jax.random.normal(kx, (B, N, QUERY_DIM), jnp.float32)
    context = jax.random.normal(kc, (B, CTX_N, QUERY_DIM), jnp.float32)
    params = init_params(kp, QUERY_DIM, QUERY_DIM, HEADS, DIM_HEAD)

    # --- self-attention path (returns kv_hist) ---
    out_s, kv_hist = memory_efficient_cross_attention(
        params, x, context=None, heads=HEADS, dim_head=DIM_HEAD)
    out_s = jax.block_until_ready(out_s)
    kv_hist = jax.block_until_ready(kv_hist)

    ref_s = reference_forward(params, x, None, heads=HEADS, dim_head=DIM_HEAD)
    ref_k = (x @ params["wk"]).reshape(B, N, HEADS, DIM_HEAD) \
        .transpose(0, 2, 1, 3).reshape(B * HEADS, N, DIM_HEAD)
    assert out_s.shape == (B, N, QUERY_DIM)
    assert kv_hist[0].shape == (B * HEADS, N, DIM_HEAD)
    assert kv_hist[1].shape == (B * HEADS, N, DIM_HEAD)
    assert jnp.allclose(kv_hist[0], ref_k, atol=1e-3, rtol=1e-3), "kv_hist mismatch"
    assert jnp.allclose(out_s, ref_s, atol=2e-3, rtol=2e-3), "self-attn mismatch"

    # --- cross-attention path (kv_hist is None) ---
    out_c, kv_none = memory_efficient_cross_attention(
        params, x, context=context, heads=HEADS, dim_head=DIM_HEAD)
    out_c = jax.block_until_ready(out_c)
    ref_c = reference_forward(params, x, context, heads=HEADS, dim_head=DIM_HEAD)
    assert out_c.shape == (B, N, QUERY_DIM)
    assert kv_none is None
    assert jnp.allclose(out_c, ref_c, atol=2e-3, rtol=2e-3), "cross-attn mismatch"

    # TODO(synk): attn_bias construction (ATTENTION_BIAS_CACHE), ref_kv_hists
    # KV substitution and the mask path are dead code in the default forward
    # (use_attn_bias=False, ref_kv_hists=[], mask=None) and are not reproduced.
    print("KERNEL_OK")
</pallas_src>

<mosaic_0001>
module attributes {stable_mosaic.version = 11 : i64} {
  func.func @_matmul_kernel(%arg0: i32, %arg1: i32, %arg2: i32, %arg3: memref<32x32xf32, #tpu.memory_space<vmem>>, %arg4: memref<32x96xf32, #tpu.memory_space<vmem>>, %arg5: memref<32x96xf32, #tpu.memory_space<vmem>>, %arg6: memref<32x96xf32, #tpu.memory_space<vmem>>) attributes {dimension_semantics = [#tpu.dimension_semantics<parallel>, #tpu.dimension_semantics<parallel>, #tpu.dimension_semantics<arbitrary>], iteration_bounds = array<i64: 1, 1, 1>, scalar_prefetch = 0 : i64, scratch_operands = 1 : i64, tpu.core_type = #tpu.core_type<tc>, window_params = [{transform_indices = @transform_0, window_bounds = array<i64: 32, 32>}, {transform_indices = @transform_1, window_bounds = array<i64: 32, 96>}, {transform_indices = @transform_2, window_bounds = array<i64: 32, 96>}]} {
    %c0_i32 = arith.constant 0 : i32
    %0 = arith.cmpi eq, %arg2, %c0_i32 : i32
    %1 = arith.extui %0 : i1 to i32
    %c0_i32_0 = arith.constant 0 : i32
    %2 = arith.cmpi ne, %1, %c0_i32_0 : i32
    scf.if %2 {
      %cst_10 = arith.constant 0.000000e+00 : f32
      %12 = vector.broadcast %cst_10 : f32 to vector<32x96xf32>
      %c0_11 = arith.constant 0 : index
      %c0_12 = arith.constant 0 : index
      %13 = vector.load %arg6[%c0_11, %c0_12] : memref<32x96xf32, #tpu.memory_space<vmem>>, vector<32x96xf32>
      tpu.vector_store %arg6[%c0_11, %c0_12], %12 {strides = array<i32>} : memref<32x96xf32, #tpu.memory_space<vmem>>, vector<32x96xf32>,
    } else {
    }
    %c0 = arith.constant 0 : index
    %c0_1 = arith.constant 0 : index
    %3 = vector.load %arg6[%c0, %c0_1] : memref<32x96xf32, #tpu.memory_space<vmem>>, vector<32x96xf32>
    %c0_2 = arith.constant 0 : index
    %c0_3 = arith.constant 0 : index
    %4 = vector.load %arg3[%c0_2, %c0_3] : memref<32x32xf32, #tpu.memory_space<vmem>>, vector<32x32xf32>
    %c0_4 = arith.constant 0 : index
    %c0_5 = arith.constant 0 : index
    %5 = vector.load %arg4[%c0_4, %c0_5] : memref<32x96xf32, #tpu.memory_space<vmem>>, vector<32x96xf32>
    %cst = arith.constant dense<0.000000e+00> : vector<32x96xf32>
    %6 = tpu.matmul %4, %5, %cst {dimension_numbers = #tpu.dot_dimension_numbers<[1], [0], [0], [1], [0, 0, 1, 1], [], []>} : vector<32x32xf32>, vector<32x96xf32>, vector<32x96xf32> -> vector<32x96xf32>
    %7 = arith.addf %3, %6 : vector<32x96xf32>
    %c0_6 = arith.constant 0 : index
    %c0_7 = arith.constant 0 : index
    %8 = vector.load %arg6[%c0_6, %c0_7] : memref<32x96xf32, #tpu.memory_space<vmem>>, vector<32x96xf32>
    tpu.vector_store %arg6[%c0_6, %c0_7], %7 {strides = array<i32>} : memref<32x96xf32, #tpu.memory_space<vmem>>, vector<32x96xf32>,
    %c0_i32_8 = arith.constant 0 : i32
    %9 = arith.cmpi eq, %arg2, %c0_i32_8 : i32
    %10 = arith.extui %9 : i1 to i32
    %c0_i32_9 = arith.constant 0 : i32
    %11 = arith.cmpi ne, %10, %c0_i32_9 : i32
    scf.if %11 {
      %c0_10 = arith.constant 0 : index
      %c0_11 = arith.constant 0 : index
      %12 = vector.load %arg6[%c0_10, %c0_11] : memref<32x96xf32, #tpu.memory_space<vmem>>, vector<32x96xf32>
      %c0_12 = arith.constant 0 : index
      %c0_13 = arith.constant 0 : index
      %13 = vector.load %arg5[%c0_12, %c0_13] : memref<32x96xf32, #tpu.memory_space<vmem>>, vector<32x96xf32>
      tpu.vector_store %arg5[%c0_12, %c0_13], %12 {strides = array<i32>} : memref<32x96xf32, #tpu.memory_space<vmem>>, vector<32x96xf32>,
    } else {
    }
    return
  }
  func.func @transform_0(%arg0: i32, %arg1: i32, %arg2: i32) -> (i32, i32) {
    %c0_i32 = arith.constant 0 : i32
    return %arg0, %arg2 : i32, i32
  }
  func.func @transform_1(%arg0: i32, %arg1: i32, %arg2: i32) -> (i32, i32) {
    %c0_i32 = arith.constant 0 : i32
    return %arg2, %arg1 : i32, i32
  }
  func.func @transform_2(%arg0: i32, %arg1: i32, %arg2: i32) -> (i32, i32) {
    %c0_i32 = arith.constant 0 : i32
    return %arg0, %arg1 : i32, i32
  }
}

</mosaic_0001>

<llo_original>
// kernel: tpu_custom_call.1
$region0: #{tpu_custom_call.1}
  #allocation0 [shape = 'u32[]', space=smem, size = 0x4, offset = 0x4, fixed_abs, tag = 'smem constant byte address 0x4 - core index']
  #allocation1 [shape = 'u32[144,128]{1,0:T(1,128)}', space=vmem, size = 0x12000, scoped, tag = 'internal scratch']
  #allocation2 [shape = 'f32[32,96]{1,0:T(8,128)}', space=vmem, size = 0x4000, scoped, tag = 'scratch operand']
  %s0 = inlined_call_operand.hbm [shape: f32[32,32], index: 0, kind: input, shape index: {}]
  %s1 = inlined_call_operand.hbm [shape: f32[32,96], index: 1, kind: input, shape index: {}]
  %s2 = inlined_call_operand.hbm [shape: f32[32,96], index: 2, kind: output, shape index: {}]
  %s3 = sld [smem:[#allocation0]]
  $region34: #{tpu_custom_call.1} parent=0
    _
  %s5 = ssub.s32 1, %s3
  %s6 = scalar_select 0, %s5, %s3
  $region1: #{tpu_custom_call.1} parent=0
    #allocation3 [shape = 'u8[16384]{0}', space=vmem, size = 0x4000, scoped, tag = 'input window, operand 0, single buffered']
    #allocation4 [shape = 's32[1]{0}', space=sflag, size = 0x4, scoped, tag = 'scoped memory for tpu_custom_call.1']
    #allocation5 [shape = 's32[1]{0}', space=sflag, size = 0x4, scoped, tag = 'scoped memory for tpu_custom_call.1']
    #allocation6 [shape = 'u8[16384]{0}', space=vmem, size = 0x4000, scoped, tag = 'input window, operand 1, single buffered']
    #allocation7 [shape = 's32[1]{0}', space=sflag, size = 0x4, scoped, tag = 'scoped memory for tpu_custom_call.1']
    #allocation8 [shape = 'u8[16384]{0}', space=vmem, size = 0x4000, scoped, tag = 'output window, operand 0, single buffered']
    %7 = vsyncpa [#allocation4], 0
    %8 = vsyncpa [#allocation7], 0
    %9 = vsyncpa [#allocation5], 0
    // Predicated region
    $region2: #{tpu_custom_call.1} parent=1 // pred_check
      _
    $region3: #{tpu_custom_call.1} parent=1 // pred_check_branch
      %11 = sbr.rel (0) target = $region5
    $region4: #{tpu_custom_call.1} parent=1 // pred_region
      %s13 = ssub.s32 512, 512
      %14 = vsyncadd [#allocation4], %s13
      %s15 = sshll.u32 [#allocation3], 4
      %s16 = int_to_ptr.vmem [resolvable:$true] %s15
      %21 = dma.hbm_to_vmem [thread:$0]  %s0, 512, %s16, [#allocation4], 128, 128, 8
    $region5: #{tpu_custom_call.1} parent=1 // pred_fallthru
      _
    // Predicated region
    $region6: #{tpu_custom_call.1} parent=1 // pred_check
      _
    $region7: #{tpu_custom_call.1} parent=1 // pred_check_branch
      %23 = sbr.rel (0) target = $region9
    $region8: #{tpu_custom_call.1} parent=1 // pred_region
      %s25 = ssub.s32 512, 512
      %26 = vsyncadd [#allocation7], %s25
      %s27 = sshll.u32 [#allocation6], 4
      %s28 = int_to_ptr.vmem [resolvable:$true] %s27
      %33 = dma.hbm_to_vmem [thread:$0]  %s1, 512, %s28, [#allocation7], 128, 128, 8
    $region9: #{tpu_custom_call.1} parent=1 // pred_fallthru
      _
    // Predicated region
    $region10: #{tpu_custom_call.1} parent=1 // pred_check
      _
    $region11: #{tpu_custom_call.1} parent=1 // pred_check_branch
      %35 = sbr.rel (0) target = $region13
    $region12: #{tpu_custom_call.1} parent=1 // pred_region
      %36 = dma.done [#allocation4], 512
    $region13: #{tpu_custom_call.1} parent=1 // pred_fallthru
      _
    // Predicated region
    $region14: #{tpu_custom_call.1} parent=1 // pred_check
      _
    $region15: #{tpu_custom_call.1} parent=1 // pred_check_branch
      %38 = sbr.rel (0) target = $region17
    $region16: #{tpu_custom_call.1} parent=1 // pred_region
      %39 = dma.done [#allocation7], 512
    $region17: #{tpu_custom_call.1} parent=1 // pred_fallthru
      _
    %p40 = scmp.eq.s32.totalorder 0, 0
    // Predicated region
    $region18: #{tpu_custom_call.1} parent=1 // pred_check
      %p41 = pneg %p40
    $region19: #{tpu_custom_call.1} parent=1 // pred_check_branch
      %43 = sbr.rel (%p41) target = $region21
    $region20: #{tpu_custom_call.1} parent=1 // pred_region
      %vm44 = vcmask 785408
      %45 = vst.msk [vmem:[#allocation2] sm:$0xff] %vm44, 0.0
      %46 = vst.msk [vmem:[#allocation2 + $0x8] sm:$0xff] %vm44, 0.0
      %47 = vst.msk [vmem:[#allocation2 + $0x10] sm:$0xff] %vm44, 0.0
      %48 = vst.msk [vmem:[#allocation2 + $0x18] sm:$0xff] %vm44, 0.0
    $region21: #{tpu_custom_call.1} parent=1 // pred_fallthru
      _
    %v49 = vld [vmem:[#allocation2] sm:$0xff]
    %v50 = vld [vmem:[#allocation2 + $0x8] sm:$0xff]
    %v51 = vld [vmem:[#allocation2 + $0x10] sm:$0xff]
    %v52 = vld [vmem:[#allocation2 + $0x18] sm:$0xff]
    %v53 = vld [vmem:[#allocation3] sm:$0xff]
    %v54 = vld [vmem:[#allocation3 + $0x8] sm:$0xff]
    %v55 = vld [vmem:[#allocation3 + $0x10] sm:$0xff]
    %v56 = vld [vmem:[#allocation3 + $0x18] sm:$0xff]
    %v57 = vld [vmem:[#allocation6] sm:$0xff]
    %v58 = vld [vmem:[#allocation6 + $0x8] sm:$0xff]
    %v59 = vld [vmem:[#allocation6 + $0x10] sm:$0xff]
    %v60 = vld [vmem:[#allocation6 + $0x18] sm:$0xff]
    %vm61 = vcmask 261120
    %v63 = vsel %vm61, %v53, 0
    %v66 = vsel %vm61, %v54, 0
    %v69 = vsel %vm61, %v55, 0
    %v72 = vsel %vm61, %v56, 0
    %74 = vmatprep.subr.mxu0 0.0
    %75 = vmatpush1.msra.mxu0 %v57
    %76 = vmatprep.subr.mxu0 0.0
    %77 = vmatpush1.msra.mxu0 %v58
    %78 = vmatprep.subr.mxu0 0.0
    %79 = vmatpush1.msra.mxu0 %v59
    %80 = vmatprep.subr.mxu0 0.0
    %81 = vmatpush1.msra.mxu0 %v60
    %82 = vmatprep.subr.mxu0 0.0
    %83 = vmatpush1.msra.mxu0 0.0
    %84 = vmatprep.subr.mxu0 0.0
    %85 = vmatpush1.msra.mxu0 0.0
    %86 = vmatprep.subr.mxu0 0.0
    %87 = vmatpush1.msra.mxu0 0.0
    %88 = vmatprep.subr.mxu0 0.0
    %89 = vmatpush1.msra.mxu0 0.0
    %90 = vmatprep.subr.mxu0 0.0
    %91 = vmatpush1.msra.mxu0 0.0
    %92 = vmatprep.subr.mxu0 0.0
    %93 = vmatpush1.msra.mxu0 0.0
    %94 = vmatprep.subr.mxu0 0.0
    %95 = vmatpush1.msra.mxu0 0.0
    %96 = vmatprep.subr.mxu0 0.0
    %97 = vmatpush1.msra.mxu0 0.0
    %98 = vmatprep.subr.mxu0 0.0
    %99 = vmatpush1.msra.mxu0 0.0
    %100 = vmatprep.subr.mxu0 0.0
    %101 = vmatpush1.msra.mxu0 0.0
    %102 = vmatprep.subr.mxu0 0.0
    %103 = vmatpush1.msra.mxu0 0.0
    %104 = vmatprep.subr.mxu0 0.0
    %105 = vmatpush1.msra.mxu0 0.0
    %106 = vmatprep.subr.mxu0 0.0
    %107 = vmatpush1.msra.mxu0 0.0
    %108 = vmatprep.subr.mxu0 0.0
    %109 = vmatpush1.msra.mxu0 0.0
    %110 = vmatprep.subr.mxu0 0.0
    %111 = vmatpush1.msra.mxu0 0.0
    %112 = vmatprep.subr.mxu0 0.0
    %113 = vmatpush1.msra.mxu0 0.0
    %114 = vmatprep.subr.mxu0 0.0
    %115 = vmatpush1.msra.mxu0 0.0
    %116 = vmatprep.subr.mxu0 0.0
    %117 = vmatpush1.msra.mxu0 0.0
    %118 = vmatprep.subr.mxu0 0.0
    %119 = vmatpush1.msra.mxu0 0.0
    %120 = vmatprep.subr.mxu0 0.0
    %121 = vmatpush1.msra.mxu0 0.0
    %122 = vmatprep.subr.mxu0 0.0
    %123 = vmatpush1.msra.mxu0 0.0
    %124 = vmatprep.subr.mxu0 0.0
    %125 = vmatpush1.msra.mxu0 0.0
    %126 = vmatprep.subr.mxu0 0.0
    %127 = vmatpush1.msra.mxu0 0.0
    %128 = vmatprep.subr.mxu0 0.0
    %129 = vmatpush1.msra.mxu0 0.0
    %130 = vmatprep.subr.mxu0 0.0
    %131 = vmatpush1.msra.mxu0 0.0
    %132 = vmatprep.subr.mxu0 0.0
    %133 = vmatpush1.msra.mxu0 0.0
    %134 = vmatprep.subr.mxu0 0.0
    %135 = vmatpush1.msra.mxu0 0.0
    %136 = vmatprep.subr.mxu0 0.0
    %137 = vmatpush1.msra.mxu0 0.0
    %138 = vmatprep.mubr.f32.mxu0 0.0
    %139 = vmatmul.mubr.f32.gmra.mrb[0].mxu0 %v63
    %v140 = vpop.f32.mrb[0].mxu0
    %v141 = vadd.f32 0.0, %v140
    %v142 = vpop.f32.mrb[0].mxu0
    %143 = vmatprep.mubr.f32.mxu0 0.0
    %144 = vmatmul.mubr.f32.gmra.mrb[0].mxu0 %v66
    %v145 = vpop.f32.mrb[0].mxu0
    %v146 = vadd.f32 0.0, %v145
    %v147 = vpop.f32.mrb[0].mxu0
    %148 = vmatprep.mubr.f32.mxu0 0.0
    %149 = vmatmul.mubr.f32.gmra.mrb[0].mxu0 %v69
    %v150 = vpop.f32.mrb[0].mxu0
    %v151 = vadd.f32 0.0, %v150
    %v152 = vpop.f32.mrb[0].mxu0
    %153 = vmatprep.mubr.f32.mxu0 0.0
    %154 = vmatmul.mubr.f32.gmra.mrb[0].mxu0 %v72
    %v155 = vpop.f32.mrb[0].mxu0
    %v156 = vadd.f32 0.0, %v155
    %v157 = vpop.f32.mrb[0].mxu0
    %158 = vdwg.mxu0
    %v159 = vadd.f32 %v49, %v141
    %v160 = vadd.f32 %v50, %v146
    %v161 = vadd.f32 %v51, %v151
    %v162 = vadd.f32 %v52, %v156
    %vm163 = vcmask 785408
    %164 = vst.msk [vmem:[#allocation2] sm:$0xff] %vm163, %v159
    %165 = vst.msk [vmem:[#allocation2 + $0x8] sm:$0xff] %vm163, %v160
    %166 = vst.msk [vmem:[#allocation2 + $0x10] sm:$0xff] %vm163, %v161
    %167 = vst.msk [vmem:[#allocation2 + $0x18] sm:$0xff] %vm163, %v162
    // Predicated region
    $region22: #{tpu_custom_call.1} parent=1 // pred_check
      %p168 = pneg %p40
    $region23: #{tpu_custom_call.1} parent=1 // pred_check_branch
      %170 = sbr.rel (%p168) target = $region25
    $region24: #{tpu_custom_call.1} parent=1 // pred_region
      %v171 = vld [vmem:[#allocation2] sm:$0xff]
      %v172 = vld [vmem:[#allocation2 + $0x8] sm:$0xff]
      %v173 = vld [vmem:[#allocation2 + $0x10] sm:$0xff]
      %v174 = vld [vmem:[#allocation2 + $0x18] sm:$0xff]
      %175 = vst.msk [vmem:[#allocation8] sm:$0xff] %vm163, %v171
      %176 = vst.msk [vmem:[#allocation8 + $0x8] sm:$0xff] %vm163, %v172
      %177 = vst.msk [vmem:[#allocation8 + $0x10] sm:$0xff] %vm163, %v173
      %178 = vst.msk [vmem:[#allocation8 + $0x18] sm:$0xff] %vm163, %v174
    $region25: #{tpu_custom_call.1} parent=1 // pred_fallthru
      _
    // Predicated region
    $region26: #{tpu_custom_call.1} parent=1 // pred_check
      _
    $region27: #{tpu_custom_call.1} parent=1 // pred_check_branch
      %180 = sbr.rel (0) target = $region29
    $region28: #{tpu_custom_call.1} parent=1 // pred_region
      %s182 = ssub.s32 512, 512
      %183 = vsyncadd [#allocation5], %s182
      %s184 = sshll.u32 [#allocation8], 4
      %s185 = int_to_ptr.vmem [resolvable:$true] %s184
      %190 = dma.vmem_to_hbm [thread:$0]  %s185, 512, %s2, [#allocation5], 128, 128, 8
    $region29: #{tpu_custom_call.1} parent=1 // pred_fallthru
      _
    // Predicated region
    $region30: #{tpu_custom_call.1} parent=1 // pred_check
      _
    $region31: #{tpu_custom_call.1} parent=1 // pred_check_branch
      %192 = sbr.rel (0) target = $region33
    $region32: #{tpu_custom_call.1} parent=1 // pred_region
      %193 = dma.done [#allocation5], 512
    $region33: #{tpu_custom_call.1} parent=1 // pred_fallthru
      _
    %194 = vsyncpa [#allocation4], 1
    %195 = vsyncpa [#allocation7], 1
    %196 = vsyncpa [#allocation5], 1

</llo_original>
